<compile_context>
chip_gen: v7x
topology: tpu7x:2x2x1
jax: 0.10.0
libtpu: 0.0.40
codegen_flags: <defaults>
</compile_context>

<pallas_src>
import functools
import math

import jax
import jax.numpy as jnp
from jax.experimental import pallas as pl
from jax.experimental.pallas import tpu as pltpu

# Conservative per-call VMEM budget (leave plenty of headroom on v7x's 64 MiB).
_VMEM_BUDGET_BYTES = 24 * 1024 * 1024


def _duplicate_kernel(x_ref, o_ref, *, m):
    # x_ref: (TILE_N, D) input block
    # o_ref: (TILE_N, m*D) lane-dense output block
    x = x_ref[...]
    # Build the m duplicates along the lane axis in registers and emit one
    # wide (unmasked) store instead of m narrow masked stores.
    o_ref[...] = jnp.concatenate([x] * m, axis=-1)


def _pick_tile_n(N, D, m, itemsize):
    """Largest divisor of N (preferring multiples of 8, capped at 1024) whose
    double-buffered (tile, D) + (tile, m*D) blocks fit the VMEM budget."""
    per_row = (D + m * D) * itemsize * 2  # x2 for double buffering
    max_rows = max(1, _VMEM_BUDGET_BYTES // max(per_row, 1))
    best = None
    for t in range(1, N + 1):
        if N % t != 0 or t > max_rows or t > 1024:
            continue
        if best is None:
            best = t
        elif (t % 8 == 0, t) > (best % 8 == 0, best):
            best = t
    return best if best is not None else N


def duplicate_forward(x, m, *, tile_n=None):
    """x: (N, *rest) -> (N, m, *rest), each slice along axis 1 a copy of x."""
    N = x.shape[0]
    rest = x.shape[1:]
    D = int(math.prod(rest)) if rest else 1
    x2 = x.reshape(N, D)

    itemsize = jnp.dtype(x.dtype).itemsize
    if tile_n is None:
        tile_n = _pick_tile_n(N, D, m, itemsize)
    if N % tile_n != 0:
        tile_n = N
    grid = (N // tile_n,)

    cost = pl.CostEstimate(
        flops=0,
        transcendentals=0,
        bytes_accessed=N * D * itemsize * (1 + m),
    )

    out_flat = pl.pallas_call(
        functools.partial(_duplicate_kernel, m=m),
        out_shape=jax.ShapeDtypeStruct((N, m * D), x.dtype),
        grid_spec=pltpu.PrefetchScalarGridSpec(
            num_scalar_prefetch=0,
            grid=grid,
            in_specs=[pl.BlockSpec((tile_n, D), lambda i: (i, 0))],
            out_specs=pl.BlockSpec((tile_n, m * D), lambda i: (i, 0)),
        ),
        compiler_params=pltpu.CompilerParams(
            dimension_semantics=("parallel",)),
        cost_estimate=cost,
    )(x2)

    # (N, m*D) -> (N, m, *rest): contiguous reshape, no data movement.
    return out_flat.reshape((N, m) + rest)


if __name__ == "__main__":
    # Small shapes consistent with the module: batch of N feature maps,
    # duplicated m times along a new axis 1.
    N, C, H = 8, 4, 32   # rest = (4, 32) -> D = 128 (one full lane width)
    m = 4

    key = jax.random.PRNGKey(0)
    x = jax.random.normal(key, (N, C, H), dtype=jnp.float32)

    out = duplicate_forward(x, m)
    out = jax.block_until_ready(out)

    # Pure-JAX reference of the PyTorch forward (cat of m identical copies).
    ref = jnp.broadcast_to(x[:, None, :, :], (N, m, C, H))

    assert out.shape == (N, m, C, H)
    assert jnp.array_equal(out, ref)
    print("KERNEL_OK")
</pallas_src>

<mosaic_0001>
module attributes {stable_mosaic.version = 11 : i64} {
  func.func @_duplicate_kernel(%arg0: i32, %arg1: memref<8x128xf32, #tpu.memory_space<vmem>>, %arg2: memref<8x512xf32, #tpu.memory_space<vmem>>) attributes {dimension_semantics = [#tpu.dimension_semantics<parallel>], iteration_bounds = array<i64: 1>, scalar_prefetch = 0 : i64, scratch_operands = 0 : i64, tpu.core_type = #tpu.core_type<tc>, window_params = [{transform_indices = @transform_0, window_bounds = array<i64: 8, 128>}, {transform_indices = @transform_1, window_bounds = array<i64: 8, 512>}]} {
    %c0 = arith.constant 0 : index
    %c0_0 = arith.constant 0 : index
    %0 = vector.load %arg1[%c0, %c0_0] : memref<8x128xf32, #tpu.memory_space<vmem>>, vector<8x128xf32>
    %1 = tpu.concatenate %0, %0, %0, %0 in 1 : vector<8x128xf32>, vector<8x128xf32>, vector<8x128xf32>, vector<8x128xf32> -> vector<8x512xf32>
    %c0_1 = arith.constant 0 : index
    %c0_2 = arith.constant 0 : index
    %2 = vector.load %arg2[%c0_1, %c0_2] : memref<8x512xf32, #tpu.memory_space<vmem>>, vector<8x512xf32>
    tpu.vector_store %arg2[%c0_1, %c0_2], %1 {strides = array<i32>} : memref<8x512xf32, #tpu.memory_space<vmem>>, vector<8x512xf32>,
    return
  }
  func.func @transform_0(%arg0: i32) -> (i32, i32) {
    %c0_i32 = arith.constant 0 : i32
    %c0_i32_0 = arith.constant 0 : i32
    return %arg0, %c0_i32 : i32, i32
  }
  func.func @transform_1(%arg0: i32) -> (i32, i32) {
    %c0_i32 = arith.constant 0 : i32
    %c0_i32_0 = arith.constant 0 : i32
    return %arg0, %c0_i32 : i32, i32
  }
}

</mosaic_0001>

<llo_original>
// kernel: tpu_custom_call.1
$region0: #{tpu_custom_call.1}
  #allocation0 [shape = 'u32[]', space=smem, size = 0x4, offset = 0x4, fixed_abs, tag = 'smem constant byte address 0x4 - core index']
  #allocation1 [shape = 'u32[144,128]{1,0:T(1,128)}', space=vmem, size = 0x12000, scoped, tag = 'internal scratch']
  %s0 = inlined_call_operand.hbm [shape: f32[8,128], index: 0, kind: input, shape index: {}]
  %s1 = inlined_call_operand.hbm [shape: f32[8,512], index: 1, kind: output, shape index: {}]
  %s2 = sld [smem:[#allocation0]]
  $region18: #{tpu_custom_call.1} parent=0
    _
  %s4 = ssub.s32 1, %s2
  %s5 = scalar_select 0, %s4, %s2
  $region1: #{tpu_custom_call.1} parent=0
    #allocation2 [shape = 'u8[4096]{0}', space=vmem, size = 0x1000, scoped, tag = 'input window, operand 0, single buffered']
    #allocation3 [shape = 's32[1]{0}', space=sflag, size = 0x4, scoped, tag = 'scoped memory for tpu_custom_call.1']
    #allocation4 [shape = 's32[1]{0}', space=sflag, size = 0x4, scoped, tag = 'scoped memory for tpu_custom_call.1']
    #allocation5 [shape = 'u8[16384]{0}', space=vmem, size = 0x4000, scoped, tag = 'output window, operand 0, single buffered']
    %6 = vsyncpa [#allocation3], 0
    %7 = vsyncpa [#allocation4], 0
    // Predicated region
    $region2: #{tpu_custom_call.1} parent=1 // pred_check
      _
    $region3: #{tpu_custom_call.1} parent=1 // pred_check_branch
      %9 = sbr.rel (0) target = $region5
    $region4: #{tpu_custom_call.1} parent=1 // pred_region
      %s11 = ssub.s32 128, 128
      %12 = vsyncadd [#allocation3], %s11
      %s14 = sshll.u32 [#allocation2], 4
      %s15 = int_to_ptr.vmem [resolvable:$true] %s14
      %17 = dma.hbm_to_vmem [thread:$0]  %s0, 128, %s15, [#allocation3]
    $region5: #{tpu_custom_call.1} parent=1 // pred_fallthru
      _
    // Predicated region
    $region6: #{tpu_custom_call.1} parent=1 // pred_check
      _
    $region7: #{tpu_custom_call.1} parent=1 // pred_check_branch
      %19 = sbr.rel (0) target = $region9
    $region8: #{tpu_custom_call.1} parent=1 // pred_region
      %20 = dma.done [#allocation3], 128
    $region9: #{tpu_custom_call.1} parent=1 // pred_fallthru
      _
    %v21 = vld [vmem:[#allocation2] sm:$0xff]
    %22 = vst [vmem:[#allocation5] sm:$0xff] %v21
    %23 = vst [vmem:[#allocation5 + $0x8] sm:$0xff] %v21
    %24 = vst [vmem:[#allocation5 + $0x10] sm:$0xff] %v21
    %25 = vst [vmem:[#allocation5 + $0x18] sm:$0xff] %v21
    // Predicated region
    $region10: #{tpu_custom_call.1} parent=1 // pred_check
      _
    $region11: #{tpu_custom_call.1} parent=1 // pred_check_branch
      %27 = sbr.rel (0) target = $region13
    $region12: #{tpu_custom_call.1} parent=1 // pred_region
      %s29 = ssub.s32 512, 512
      %30 = vsyncadd [#allocation4], %s29
      %s32 = sshll.u32 [#allocation5], 4
      %s33 = int_to_ptr.vmem [resolvable:$true] %s32
      %35 = dma.vmem_to_hbm [thread:$0]  %s33, 512, %s1, [#allocation4]
    $region13: #{tpu_custom_call.1} parent=1 // pred_fallthru
      _
    // Predicated region
    $region14: #{tpu_custom_call.1} parent=1 // pred_check
      _
    $region15: #{tpu_custom_call.1} parent=1 // pred_check_branch
      %37 = sbr.rel (0) target = $region17
    $region16: #{tpu_custom_call.1} parent=1 // pred_region
      %38 = dma.done [#allocation4], 512
    $region17: #{tpu_custom_call.1} parent=1 // pred_fallthru
      _
    %39 = vsyncpa [#allocation3], 1
    %40 = vsyncpa [#allocation4], 1

</llo_original>
